<compile_context>
chip_gen: v7x
topology: tpu7x:2x2x1
jax: 0.10.0
libtpu: 0.0.40
codegen_flags: <defaults>
</compile_context>

<pallas_src>
import jax
import jax.numpy as jnp
from jax.experimental import pallas as pl
from jax.experimental.pallas import tpu as pltpu


def sac_actor_kernel(x_ref, w1_ref, b1_ref, w2_ref, b2_ref, u_ref, o_ref):
    # ---- Linear 1 (bf16 MXU, f32 accumulate) + bias + ReLU -----------------
    h = jnp.dot(x_ref[...].astype(jnp.bfloat16), w1_ref[...],
                preferred_element_type=jnp.float32)
    h = jnp.maximum(h + b1_ref[...], 0.0)          # (TB, 256) + (1, 256)

    # ---- Linear 2 (bf16 MXU, f32 accumulate) + bias + Sigmoid --------------
    logits = jnp.dot(h.astype(jnp.bfloat16), w2_ref[...],
                     preferred_element_type=jnp.float32)
    p = jax.nn.sigmoid(logits + b2_ref[...])       # (TB, A_pad) + (1, A_pad)

    # ---- Bernoulli(p): compare against precomputed uniforms ----------------
    # Lane-dense (TB, 128*k) store -> unmasked vst.
    o_ref[...] = (u_ref[...] < p).astype(jnp.float32)


def sac_actor_forward(state, w1, b1, w2, b2, key, *, block_b=512):
    """state: (B, S) f32; w1: (S, 256); b1: (1, 256); w2: (256, A); b2: (1, A).

    Returns float32 (B, A) array of {0., 1.} samples ~ Bernoulli(sigmoid(net)).
    """
    B, S = state.shape
    H = w1.shape[1]
    A = w2.shape[1]

    LANE = 128
    A_pad = ((A + LANE - 1) // LANE) * LANE        # lane-dense output width

    # Batch tile: whole batch if it is small, otherwise a multiple of 8 rows.
    if B <= block_b:
        TB = B
        B_pad = B
    else:
        TB = block_b
        B_pad = ((B + TB - 1) // TB) * TB

    x = state
    if B_pad != B:
        x = jnp.zeros((B_pad, S), state.dtype).at[:B].set(state)

    # Weights in bf16 (MXU-native, halves weight DMA); biases stay f32.
    w1b = w1.astype(jnp.bfloat16)
    w2b = jnp.zeros((H, A_pad), jnp.bfloat16).at[:, :A].set(w2.astype(jnp.bfloat16))
    b2p = jnp.zeros((1, A_pad), jnp.float32).at[:, :A].set(b2.astype(jnp.float32))

    # Uniform [0,1) draw per (padded) output element, generated once outside
    # the kernel -> independent randomness per batch tile by construction.
    u = jax.random.uniform(key, (B_pad, A_pad), jnp.float32)

    grid = (B_pad // TB,)

    out = pl.pallas_call(
        sac_actor_kernel,
        out_shape=jax.ShapeDtypeStruct((B_pad, A_pad), jnp.float32),
        grid=grid,
        in_specs=[
            pl.BlockSpec((TB, S), lambda i: (i, 0)),       # state tile (streamed)
            pl.BlockSpec((S, H), lambda i: (0, 0)),        # w1 (VMEM-resident)
            pl.BlockSpec((1, H), lambda i: (0, 0)),        # b1 (VMEM-resident)
            pl.BlockSpec((H, A_pad), lambda i: (0, 0)),    # w2 (VMEM-resident)
            pl.BlockSpec((1, A_pad), lambda i: (0, 0)),    # b2 (VMEM-resident)
            pl.BlockSpec((TB, A_pad), lambda i: (i, 0)),   # uniforms (streamed)
        ],
        out_specs=pl.BlockSpec((TB, A_pad), lambda i: (i, 0)),
        compiler_params=pltpu.CompilerParams(
            dimension_semantics=("parallel",),             # batch tiles independent
        ),
    )(x, w1b, b1, w2b, b2p, u)

    return out[:B, :A]


def init_params(key, state_dim, action_dim, hidden=256):
    """Deterministic init mimicking nn.Linear's uniform(-1/sqrt(in), 1/sqrt(in))."""
    k1, k2, k3, k4 = jax.random.split(key, 4)
    lim1 = 1.0 / jnp.sqrt(jnp.float32(state_dim))
    lim2 = 1.0 / jnp.sqrt(jnp.float32(hidden))
    w1 = jax.random.uniform(k1, (state_dim, hidden), jnp.float32, -lim1, lim1)
    b1 = jax.random.uniform(k2, (1, hidden), jnp.float32, -lim1, lim1)
    w2 = jax.random.uniform(k3, (hidden, action_dim), jnp.float32, -lim2, lim2)
    b2 = jax.random.uniform(k4, (1, action_dim), jnp.float32, -lim2, lim2)
    return w1, b1, w2, b2


if __name__ == "__main__":
    key = jax.random.PRNGKey(0)
    k_state, k_params, k_bern = jax.random.split(key, 3)

    batch = 16
    state_dim = 32
    action_dim = 8

    state = jax.random.normal(k_state, (batch, state_dim), jnp.float32)
    w1, b1, w2, b2 = init_params(k_params, state_dim, action_dim)

    # block_b=8 -> grid of 2 batch tiles, exercising the tiled/pipelined path.
    actions = sac_actor_forward(state, w1, b1, w2, b2, k_bern, block_b=8)
    actions = jax.block_until_ready(actions)

    # sanity: output is exactly {0.0, 1.0} with the right shape/dtype
    assert actions.shape == (batch, action_dim)
    assert actions.dtype == jnp.float32
    assert bool(jnp.all((actions == 0.0) | (actions == 1.0)))

    print("KERNEL_OK")
</pallas_src>

<mosaic_0001>
module attributes {stable_mosaic.version = 11 : i64} {
  func.func @sac_actor_kernel(%arg0: i32, %arg1: memref<8x32xf32, #tpu.memory_space<vmem>>, %arg2: memref<32x256xbf16, #tpu.memory_space<vmem>>, %arg3: memref<1x256xf32, #tpu.memory_space<vmem>>, %arg4: memref<256x128xbf16, #tpu.memory_space<vmem>>, %arg5: memref<1x128xf32, #tpu.memory_space<vmem>>, %arg6: memref<8x128xf32, #tpu.memory_space<vmem>>, %arg7: memref<8x128xf32, #tpu.memory_space<vmem>>) attributes {dimension_semantics = [#tpu.dimension_semantics<parallel>], iteration_bounds = array<i64: 2>, scalar_prefetch = 0 : i64, scratch_operands = 0 : i64, tpu.core_type = #tpu.core_type<tc>, window_params = [{transform_indices = @transform_0, window_bounds = array<i64: 8, 32>}, {pipeline_mode = #tpu.pipeline_mode<synchronous>, transform_indices = @transform_1, window_bounds = array<i64: 32, 256>}, {pipeline_mode = #tpu.pipeline_mode<synchronous>, transform_indices = @transform_2, window_bounds = array<i64: 1, 256>}, {pipeline_mode = #tpu.pipeline_mode<synchronous>, transform_indices = @transform_3, window_bounds = array<i64: 256, 128>}, {pipeline_mode = #tpu.pipeline_mode<synchronous>, transform_indices = @transform_4, window_bounds = array<i64: 1, 128>}, {transform_indices = @transform_5, window_bounds = array<i64: 8, 128>}, {transform_indices = @transform_6, window_bounds = array<i64: 8, 128>}]} {
    %c0 = arith.constant 0 : index
    %c0_0 = arith.constant 0 : index
    %0 = vector.load %arg1[%c0, %c0_0] : memref<8x32xf32, #tpu.memory_space<vmem>>, vector<8x32xf32>
    %1 = arith.truncf %0 : vector<8x32xf32> to vector<8x32xbf16>
    %c0_1 = arith.constant 0 : index
    %c0_2 = arith.constant 0 : index
    %2 = vector.load %arg2[%c0_1, %c0_2] : memref<32x256xbf16, #tpu.memory_space<vmem>>, vector<32x256xbf16>
    %cst = arith.constant dense<0.000000e+00> : vector<8x256xf32>
    %3 = tpu.matmul %1, %2, %cst {dimension_numbers = #tpu.dot_dimension_numbers<[1], [0], [0], [1], [0, 0, 1, 1], [], []>} : vector<8x32xbf16>, vector<32x256xbf16>, vector<8x256xf32> -> vector<8x256xf32>
    %c0_3 = arith.constant 0 : index
    %c0_4 = arith.constant 0 : index
    %4 = vector.load %arg3[%c0_3, %c0_4] : memref<1x256xf32, #tpu.memory_space<vmem>>, vector<1x256xf32>
    %5 = vector.broadcast %4 : vector<1x256xf32> to vector<8x256xf32>
    %6 = arith.addf %3, %5 : vector<8x256xf32>
    %cst_5 = arith.constant 0.000000e+00 : f32
    %7 = vector.broadcast %cst_5 : f32 to vector<8x256xf32>
    %8 = arith.maximumf %6, %7 : vector<8x256xf32>
    %9 = arith.truncf %8 : vector<8x256xf32> to vector<8x256xbf16>
    %c0_6 = arith.constant 0 : index
    %c0_7 = arith.constant 0 : index
    %10 = vector.load %arg4[%c0_6, %c0_7] : memref<256x128xbf16, #tpu.memory_space<vmem>>, vector<256x128xbf16>
    %cst_8 = arith.constant dense<0.000000e+00> : vector<8x128xf32>
    %11 = tpu.matmul %9, %10, %cst_8 {dimension_numbers = #tpu.dot_dimension_numbers<[1], [0], [0], [1], [0, 0, 1, 1], [], []>} : vector<8x256xbf16>, vector<256x128xbf16>, vector<8x128xf32> -> vector<8x128xf32>
    %c0_9 = arith.constant 0 : index
    %c0_10 = arith.constant 0 : index
    %12 = vector.load %arg5[%c0_9, %c0_10] : memref<1x128xf32, #tpu.memory_space<vmem>>, vector<1x128xf32>
    %13 = vector.broadcast %12 : vector<1x128xf32> to vector<8x128xf32>
    %14 = arith.addf %11, %13 : vector<8x128xf32>
    %15 = arith.negf %14 : vector<8x128xf32>
    %16 = math.exp %15 : vector<8x128xf32>
    %cst_11 = arith.constant 1.000000e+00 : f32
    %17 = vector.broadcast %cst_11 : f32 to vector<8x128xf32>
    %18 = arith.addf %17, %16 : vector<8x128xf32>
    %19 = arith.divf %17, %18 : vector<8x128xf32>
    %c0_12 = arith.constant 0 : index
    %c0_13 = arith.constant 0 : index
    %20 = vector.load %arg6[%c0_12, %c0_13] : memref<8x128xf32, #tpu.memory_space<vmem>>, vector<8x128xf32>
    %21 = arith.cmpf olt, %20, %19 : vector<8x128xf32>
    %22 = arith.extui %21 : vector<8x128xi1> to vector<8x128xi32>
    %23 = arith.sitofp %22 : vector<8x128xi32> to vector<8x128xf32>
    %c0_14 = arith.constant 0 : index
    %c0_15 = arith.constant 0 : index
    %24 = vector.load %arg7[%c0_14, %c0_15] : memref<8x128xf32, #tpu.memory_space<vmem>>, vector<8x128xf32>
    tpu.vector_store %arg7[%c0_14, %c0_15], %23 {strides = array<i32>} : memref<8x128xf32, #tpu.memory_space<vmem>>, vector<8x128xf32>,
    return
  }
  func.func @transform_0(%arg0: i32) -> (i32, i32) {
    %c0_i32 = arith.constant 0 : i32
    %c0_i32_0 = arith.constant 0 : i32
    return %arg0, %c0_i32 : i32, i32
  }
  func.func @transform_1(%arg0: i32) -> (i32, i32) {
    %c0_i32 = arith.constant 0 : i32
    %c0_i32_0 = arith.constant 0 : i32
    %c0_i32_1 = arith.constant 0 : i32
    return %c0_i32, %c0_i32_0 : i32, i32
  }
  func.func @transform_2(%arg0: i32) -> (i32, i32) {
    %c0_i32 = arith.constant 0 : i32
    %c0_i32_0 = arith.constant 0 : i32
    %c0_i32_1 = arith.constant 0 : i32
    return %c0_i32, %c0_i32_0 : i32, i32
  }
  func.func @transform_3(%arg0: i32) -> (i32, i32) {
    %c0_i32 = arith.constant 0 : i32
    %c0_i32_0 = arith.constant 0 : i32
    %c0_i32_1 = arith.constant 0 : i32
    return %c0_i32, %c0_i32_0 : i32, i32
  }
  func.func @transform_4(%arg0: i32) -> (i32, i32) {
    %c0_i32 = arith.constant 0 : i32
    %c0_i32_0 = arith.constant 0 : i32
    %c0_i32_1 = arith.constant 0 : i32
    return %c0_i32, %c0_i32_0 : i32, i32
  }
  func.func @transform_5(%arg0: i32) -> (i32, i32) {
    %c0_i32 = arith.constant 0 : i32
    %c0_i32_0 = arith.constant 0 : i32
    return %arg0, %c0_i32 : i32, i32
  }
  func.func @transform_6(%arg0: i32) -> (i32, i32) {
    %c0_i32 = arith.constant 0 : i32
    %c0_i32_0 = arith.constant 0 : i32
    return %arg0, %c0_i32 : i32, i32
  }
}

</mosaic_0001>

<llo_original>
// kernel: tpu_custom_call.1
$region0: #{tpu_custom_call.1}
  #allocation0 [shape = 'u32[]', space=smem, size = 0x4, offset = 0x4, fixed_abs, tag = 'smem constant byte address 0x4 - core index']
  #allocation1 [shape = 'u32[144,128]{1,0:T(1,128)}', space=vmem, size = 0x12000, scoped, tag = 'internal scratch']
  %s0 = inlined_call_operand.hbm [shape: f32[16,32], index: 0, kind: input, shape index: {}]
  %s1 = inlined_call_operand.hbm [shape: bf16[32,256], index: 1, kind: input, shape index: {}]
  %s2 = inlined_call_operand.vmem [shape: f32[1,256], index: 2, kind: input, shape index: {}]
  %s3 = inlined_call_operand.hbm [shape: bf16[256,128], index: 3, kind: input, shape index: {}]
  %s4 = inlined_call_operand.hbm [shape: f32[1,128], index: 4, kind: input, shape index: {}]
  %s5 = inlined_call_operand.vmem [shape: f32[16,128], index: 5, kind: input, shape index: {}]
  %s6 = inlined_call_operand.hbm [shape: f32[16,128], index: 6, kind: output, shape index: {}]
  %s7 = sld [smem:[#allocation0]]
  $region73: #{tpu_custom_call.1} parent=0
    _
  %s9 = ssub.s32 1, %s7
  %s10 = scalar_select 0, %s9, %s7
  $region1: #{tpu_custom_call.1} parent=0
    #allocation2 [shape = 'u8[8192]{0}', space=vmem, size = 0x2000, scoped, tag = 'input window, operand 0']
    #allocation3 [shape = 's32[2]{0}', space=sflag, size = 0x8, scoped, tag = 'scoped memory for tpu_custom_call.1']
    #allocation4 [shape = 's32[2]{0}', space=sflag, size = 0x8, scoped, tag = 'scoped memory for tpu_custom_call.1']
    #allocation5 [shape = 'u8[16384]{0}', space=vmem, size = 0x4000, scoped, tag = 'input window, operand 1, single buffered']
    #allocation6 [shape = 's32[1]{0}', space=sflag, size = 0x4, scoped, tag = 'scoped memory for tpu_custom_call.1']
    #allocation7 [shape = 'u8[65536]{0}', space=vmem, size = 0x10000, scoped, tag = 'input window, operand 3, single buffered']
    #allocation8 [shape = 'u8[512]{0}', space=vmem, size = 0x400, scoped, tag = 'input window, operand 4, single buffered']
    #allocation9 [shape = 's32[1]{0}', space=sflag, size = 0x4, scoped, tag = 'scoped memory for tpu_custom_call.1']
    #allocation10 [shape = 'u8[8192]{0}', space=vmem, size = 0x2000, scoped, tag = 'output window, operand 0']
    %11 = vsyncpa [#allocation3], 0
    %s12 = scalar_lea.sflag [#allocation3], 1
    %13 = vsyncpa %s12, 0
    %14 = vsyncpa [#allocation6], 0
    %15 = vsyncpa [#allocation9], 0
    %16 = vsyncpa [#allocation4], 0
    %s17 = scalar_lea.sflag [#allocation4], 1
    %18 = vsyncpa %s17, 0
    loop: start=0, step=1, limit=4
    $region2: #{tpu_custom_call.1} parent=1 // loop_pre_header
      _
    $region3: #{tpu_custom_call.1} parent=1 // loop_header
      %s20 = sphi 0, %s24
      %p21 = scmp.ge.s32.totalorder %s20, 4
      %s30 = sphi 0, %s32
      %s33 = sphi 0, %s30
      %s34 = sphi 0, %s33
      %s50 = sphi 0, %s34
      %s54 = sphi 0, %s54
      %s56 = sphi 0, %s54
      %s57 = sphi 0, %s56
      %s71 = sphi 0, %s57
      %s75 = sphi 0, %s75
      %s77 = sphi 0, %s75
      %s78 = sphi 0, %s77
      %s92 = sphi 0, %s78
      %s96 = sphi 0, %s96
      %s98 = sphi 0, %s96
      %s99 = sphi 0, %s98
      %s113 = sphi 0, %s99
      %s117 = sphi 0, %s117
      %s119 = sphi 0, %s117
      %s120 = sphi 0, %s119
      %s134 = sphi 0, %s120
      %s140 = sphi 0, %s142
      %s143 = sphi 0, %s140
      %s144 = sphi 0, %s143
      %s160 = sphi 0, %s144
      %s166 = sphi 0, %s168
      %s169 = sphi 0, %s166
      %s170 = sphi 0, %s169
      %s186 = sphi 0, %s170
    $region4: #{tpu_custom_call.1} parent=1 // loop_header_branch
      %23 = sbr.rel (%p21) target = $region8
    $region5: #{tpu_custom_call.1} parent=1 // loop_body
      %s25 = ssub.s32 %s20, 1
      %s26 = ssub.s32 %s20, 2
      %s27 = sadd.s32 %s20, 1
      %s28 = ssub.s32 %s20, %s27
      %p29 = scmp.eq.s32.totalorder %s28, 0
      %s31 = sadd.s32 %s30, 1
      %s32 = scalar_select %p29, %s30, %s31
      %p35 = pneg %p29
      %p36 = scmp.eq.s32.totalorder %s20, 1
      %p37 = por %p35, %p36
      %p38 = scmp.ne.s32.totalorder %s30, %s33
      %p39 = scmp.eq.s32.totalorder %s20, 0
      %p40 = por %p38, %p39
      %p41 = scmp.ne.s32.totalorder %s30, %s33
      %p42 = scmp.eq.s32.totalorder %s25, 1
      %p43 = por %p41, %p42
      %p44 = scmp.ne.s32.totalorder %s33, %s34
      %p45 = scmp.eq.s32.totalorder %s25, 0
      %p46 = por %p44, %p45
      %p47 = scmp.ne.s32.totalorder %s33, %s34
      %p48 = scmp.eq.s32.totalorder %s26, 1
      %p49 = por %p47, %p48
      %p51 = scmp.ne.s32.totalorder %s34, %s50
      %p52 = scmp.eq.s32.totalorder %s26, 0
      %p53 = por %p51, %p52
      %s55 = sadd.s32 %s54, 1
      %p58 = scmp.eq.s32.totalorder %s20, 1
      %p59 = scmp.ne.s32.totalorder %s54, %s56
      %p60 = scmp.eq.s32.totalorder %s20, 0
      %p61 = por %p59, %p60
      %p62 = scmp.ne.s32.totalorder %s54, %s56
      %p63 = scmp.eq.s32.totalorder %s25, 1
      %p64 = por %p62, %p63
      %p65 = scmp.ne.s32.totalorder %s56, %s57
      %p66 = scmp.eq.s32.totalorder %s25, 0
      %p67 = por %p65, %p66
      %p68 = scmp.ne.s32.totalorder %s56, %s57
      %p69 = scmp.eq.s32.totalorder %s26, 1
      %p70 = por %p68, %p69
      %p72 = scmp.ne.s32.totalorder %s57, %s71
      %p73 = scmp.eq.s32.totalorder %s26, 0
      %p74 = por %p72, %p73
      %s76 = sadd.s32 %s75, 1
      %p79 = scmp.eq.s32.totalorder %s20, 1
      %p80 = scmp.ne.s32.totalorder %s75, %s77
      %p81 = scmp.eq.s32.totalorder %s20, 0
      %p82 = por %p80, %p81
      %p83 = scmp.ne.s32.totalorder %s75, %s77
      %p84 = scmp.eq.s32.totalorder %s25, 1
      %p85 = por %p83, %p84
      %p86 = scmp.ne.s32.totalorder %s77, %s78
      %p87 = scmp.eq.s32.totalorder %s25, 0
      %p88 = por %p86, %p87
      %p89 = scmp.ne.s32.totalorder %s77, %s78
      %p90 = scmp.eq.s32.totalorder %s26, 1
      %p91 = por %p89, %p90
      %p93 = scmp.ne.s32.totalorder %s78, %s92
      %p94 = scmp.eq.s32.totalorder %s26, 0
      %p95 = por %p93, %p94
      %s97 = sadd.s32 %s96, 1
      %p100 = scmp.eq.s32.totalorder %s20, 1
      %p101 = scmp.ne.s32.totalorder %s96, %s98
      %p102 = scmp.eq.s32.totalorder %s20, 0
      %p103 = por %p101, %p102
      %p104 = scmp.ne.s32.totalorder %s96, %s98
      %p105 = scmp.eq.s32.totalorder %s25, 1
      %p106 = por %p104, %p105
      %p107 = scmp.ne.s32.totalorder %s98, %s99
      %p108 = scmp.eq.s32.totalorder %s25, 0
      %p109 = por %p107, %p108
      %p110 = scmp.ne.s32.totalorder %s98, %s99
      %p111 = scmp.eq.s32.totalorder %s26, 1
      %p112 = por %p110, %p111
      %p114 = scmp.ne.s32.totalorder %s99, %s113
      %p115 = scmp.eq.s32.totalorder %s26, 0
      %p116 = por %p114, %p115
      %s118 = sadd.s32 %s117, 1
      %p121 = scmp.eq.s32.totalorder %s20, 1
      %p122 = scmp.ne.s32.totalorder %s117, %s119
      %p123 = scmp.eq.s32.totalorder %s20, 0
      %p124 = por %p122, %p123
      %p125 = scmp.ne.s32.totalorder %s117, %s119
      %p126 = scmp.eq.s32.totalorder %s25, 1
      %p127 = por %p125, %p126
      %p128 = scmp.ne.s32.totalorder %s119, %s120
      %p129 = scmp.eq.s32.totalorder %s25, 0
      %p130 = por %p128, %p129
      %p131 = scmp.ne.s32.totalorder %s119, %s120
      %p132 = scmp.eq.s32.totalorder %s26, 1
      %p133 = por %p131, %p132
      %p135 = scmp.ne.s32.totalorder %s120, %s134
      %p136 = scmp.eq.s32.totalorder %s26, 0
      %p137 = por %p135, %p136
      %s138 = ssub.s32 %s20, %s27
      %p139 = scmp.eq.s32.totalorder %s138, 0
      %s141 = sadd.s32 %s140, 1
      %s142 = scalar_select %p139, %s140, %s141
      %p145 = pneg %p139
      %p146 = scmp.eq.s32.totalorder %s20, 1
      %p147 = por %p145, %p146
      %p148 = scmp.ne.s32.totalorder %s140, %s143
      %p149 = scmp.eq.s32.totalorder %s20, 0
      %p150 = por %p148, %p149
      %p151 = scmp.ne.s32.totalorder %s140, %s143
      %p152 = scmp.eq.s32.totalorder %s25, 1
      %p153 = por %p151, %p152
      %p154 = scmp.ne.s32.totalorder %s143, %s144
      %p155 = scmp.eq.s32.totalorder %s25, 0
      %p156 = por %p154, %p155
      %p157 = scmp.ne.s32.totalorder %s143, %s144
      %p158 = scmp.eq.s32.totalorder %s26, 1
      %p159 = por %p157, %p158
      %p161 = scmp.ne.s32.totalorder %s144, %s160
      %p162 = scmp.eq.s32.totalorder %s26, 0
      %p163 = por %p161, %p162
      %s164 = ssub.s32 %s20, %s27
      %p165 = scmp.eq.s32.totalorder %s164, 0
      %s167 = sadd.s32 %s166, 1
      %s168 = scalar_select %p165, %s166, %s167
      %p171 = pneg %p165
      %p172 = scmp.eq.s32.totalorder %s20, 1
      %p173 = por %p171, %p172
      %p174 = scmp.ne.s32.totalorder %s166, %s169
      %p175 = scmp.eq.s32.totalorder %s20, 0
      %p176 = por %p174, %p175
      %p177 = scmp.ne.s32.totalorder %s166, %s169
      %p178 = scmp.eq.s32.totalorder %s25, 1
      %p179 = por %p177, %p178
      %p180 = scmp.ne.s32.totalorder %s169, %s170
      %p181 = scmp.eq.s32.totalorder %s25, 0
      %p182 = por %p180, %p181
      %p183 = scmp.ne.s32.totalorder %s169, %s170
      %p184 = scmp.eq.s32.totalorder %s26, 1
      %p185 = por %p183, %p184
      %p187 = scmp.ne.s32.totalorder %s170, %s186
      %p188 = scmp.eq.s32.totalorder %s26, 0
      %p189 = por %p187, %p188
      %p190 = scmp.le.s32.totalorder 1, %s20
      %p191 = scmp.lt.s32.totalorder %s20, 3
      %p192 = pnand %p190, %p191
      %p193 = pneg %p192
      // Predicated region
      $region9: #{tpu_custom_call.1} parent=5 // pred_check
        _
      $region10: #{tpu_custom_call.1} parent=5 // pred_check_branch
        %195 = sbr.rel (%p192) target = $region12
      $region11: #{tpu_custom_call.1} parent=5 // pred_region
        %s196 = ssub.s32 %s20, 1
        // Predicated region
        $region13: #{tpu_custom_call.1} parent=11 // pred_check
          %p197 = pneg %p67
        $region14: #{tpu_custom_call.1} parent=11 // pred_check_branch
          %199 = sbr.rel (%p197) target = $region16
        $region15: #{tpu_custom_call.1} parent=11 // pred_region
          %s201 = ssub.s32 512, 512
          %202 = vsyncadd [#allocation6], %s201
          %s203 = sshll.u32 [#allocation5], 4
          %s204 = int_to_ptr.vmem [resolvable:$true] %s203
          %209 = dma.hbm_to_vmem [thread:$0]  %s1, 512, %s204, [#allocation6], 128, 128, 8
        $region16: #{tpu_custom_call.1} parent=11 // pred_fallthru
          _
        // Predicated region
        $region17: #{tpu_custom_call.1} parent=11 // pred_check
          %p210 = pneg %p88
        $region18: #{tpu_custom_call.1} parent=11 // pred_check_branch
          %212 = sbr.rel (%p210) target = $region20
        $region19: #{tpu_custom_call.1} parent=11 // pred_region
          _
        $region20: #{tpu_custom_call.1} parent=11 // pred_fallthru
          _
        // Predicated region
        $region21: #{tpu_custom_call.1} parent=11 // pred_check
          %p213 = pneg %p109
        $region22: #{tpu_custom_call.1} parent=11 // pred_check_branch
          %215 = sbr.rel (%p213) target = $region24
        $region23: #{tpu_custom_call.1} parent=11 // pred_region
          %s217 = ssub.s32 2048, 2048
          %218 = vsyncadd [#allocation6], %s217
          %s219 = sshll.u32 [#allocation7], 4
          %s220 = int_to_ptr.vmem [resolvable:$true] %s219
          %225 = dma.hbm_to_vmem [thread:$0]  %s3, 2048, %s220, [#allocation6], 64, 64, 4
        $region24: #{tpu_custom_call.1} parent=11 // pred_fallthru
          _
        // Predicated region
        $region25: #{tpu_custom_call.1} parent=11 // pred_check
          %p226 = pneg %p130
        $region26: #{tpu_custom_call.1} parent=11 // pred_check_branch
          %228 = sbr.rel (%p226) target = $region28
        $region27: #{tpu_custom_call.1} parent=11 // pred_region
          %s230 = ssub.s32 16, 16
          %231 = vsyncadd [#allocation9], %s230
          %s233 = sshll.u32 [#allocation8], 4
          %s234 = int_to_ptr.vmem [resolvable:$true] %s233
          %236 = dma.hbm_to_vmem [thread:$0]  %s4, 16, %s234, [#allocation9]
        $region28: #{tpu_custom_call.1} parent=11 // pred_fallthru
          _
      $region12: #{tpu_custom_call.1} parent=5 // pred_fallthru
        _
      %p237 = scmp.lt.s32.totalorder %s20, 2
      // Predicated region
      $region29: #{tpu_custom_call.1} parent=5 // pred_check
        %p238 = pneg %p237
      $region30: #{tpu_custom_call.1} parent=5 // pred_check_branch
        %240 = sbr.rel (%p238) target = $region32
      $region31: #{tpu_custom_call.1} parent=5 // pred_region
        // Predicated region
        $region33: #{tpu_custom_call.1} parent=31 // pred_check
          %p241 = pneg %p40
        $region34: #{tpu_custom_call.1} parent=31 // pred_check_branch
          %243 = sbr.rel (%p241) target = $region36
        $region35: #{tpu_custom_call.1} parent=31 // pred_region
          %s244 = sand.u32 %s30, 1
          %s245 = scalar_lea.sflag [#allocation3], %s244
          %s246 = sand.u32 %s30, 1
          %s247 = smul.addr %s246, 8
          %s248 = scalar_lea.vmem [#allocation2], %s247
          %s250 = ssub.s32 128, 128
          %251 = vsyncadd %s245, %s250
          %s252 = smul.addr %s20, 128
          %s253 = scalar_lea.hbm %s0, %s252
          %s255 = sshll.u32 %s248, 4
          %s256 = int_to_ptr.vmem [resolvable:$true] %s255
          %258 = dma.hbm_to_vmem [thread:$0]  %s253, 128, %s256, %s245
        $region36: #{tpu_custom_call.1} parent=31 // pred_fallthru
          _
        // Predicated region
        $region37: #{tpu_custom_call.1} parent=31 // pred_check
          %p259 = pneg %p150
        $region38: #{tpu_custom_call.1} parent=31 // pred_check_branch
          %261 = sbr.rel (%p259) target = $region40
        $region39: #{tpu_custom_call.1} parent=31 // pred_region
          %p262 = scmp.lt.s32.totalorder %s20, 1
          %s263 = scalar_select %p262, %s20, 1
          %s264 = smul.addr %s263, 8
          %s265 = scalar_lea.vmem %s5, %s264
        $region40: #{tpu_custom_call.1} parent=31 // pred_fallthru
          _
      $region32: #{tpu_custom_call.1} parent=5 // pred_fallthru
        _
      %p266 = scmp.le.s32.totalorder 1, %s20
      %p267 = scmp.lt.s32.totalorder %s20, 3
      %p268 = pnand %p266, %p267
      %p269 = pneg %p268
      // Predicated region
      $region41: #{tpu_custom_call.1} parent=5 // pred_check
        _
      $region42: #{tpu_custom_call.1} parent=5 // pred_check_branch
        %271 = sbr.rel (%p268) target = $region44
      $region43: #{tpu_custom_call.1} parent=5 // pred_region
        %s272 = ssub.s32 %s20, 1
        %s273 = sand.u32 %s33, 1
        %s274 = scalar_lea.sflag [#allocation3], %s273
        %s275 = sand.u32 %s33, 1
        %s276 = smul.addr %s275, 8
        %s277 = scalar_lea.vmem [#allocation2], %s276
        // Predicated region
        $region45: #{tpu_custom_call.1} parent=43 // pred_check
          %p278 = pneg %p46
        $region46: #{tpu_custom_call.1} parent=43 // pred_check_branch
          %280 = sbr.rel (%p278) target = $region48
        $region47: #{tpu_custom_call.1} parent=43 // pred_region
          %281 = dma.done %s274, 128
        $region48: #{tpu_custom_call.1} parent=43 // pred_fallthru
          _
        // Predicated region
        $region49: #{tpu_custom_call.1} parent=43 // pred_check
          %p282 = pneg %p67
        $region50: #{tpu_custom_call.1} parent=43 // pred_check_branch
          %284 = sbr.rel (%p282) target = $region52
        $region51: #{tpu_custom_call.1} parent=43 // pred_region
          %285 = dma.done [#allocation6], 512
        $region52: #{tpu_custom_call.1} parent=43 // pred_fallthru
          _
        // Predicated region
        $region53: #{tpu_custom_call.1} parent=43 // pred_check
          %p286 = pneg %p109
        $region54: #{tpu_custom_call.1} parent=43 // pred_check_branch
          %288 = sbr.rel (%p286) target = $region56
        $region55: #{tpu_custom_call.1} parent=43 // pred_region
          %289 = dma.done [#allocation6], 2048
        $region56: #{tpu_custom_call.1} parent=43 // pred_fallthru
          _
        // Predicated region
        $region57: #{tpu_custom_call.1} parent=43 // pred_check
          %p290 = pneg %p130
        $region58: #{tpu_custom_call.1} parent=43 // pred_check_branch
          %292 = sbr.rel (%p290) target = $region60
        $region59: #{tpu_custom_call.1} parent=43 // pred_region
          %293 = dma.done [#allocation9], 16
        $region60: #{tpu_custom_call.1} parent=43 // pred_fallthru
          _
        %s294 = sand.u32 %s33, 1
        %s295 = scalar_lea.sflag [#allocation3], %s294
        %s296 = sand.u32 %s33, 1
        %s297 = smul.addr %s296, 8
        %s298 = scalar_lea.vmem [#allocation2], %s297
        %p299 = pneg %p46
        %p300 = pneg %p43
        %p301 = pneg %p67
        %p302 = pneg %p64
        %p303 = pneg %p88
        %p304 = pneg %p85
        %p305 = pneg %p109
        %p306 = pneg %p106
        %p307 = pneg %p130
        %p308 = pneg %p127
        %p309 = scmp.lt.s32.totalorder %s25, 1
        %s310 = scalar_select %p309, %s25, 1
        %s311 = smul.addr %s310, 8
        %s312 = scalar_lea.vmem %s5, %s311
        %p313 = pneg %p156
        %p314 = pneg %p153
        %p315 = pneg %p182
        %p316 = pneg %p179
        %s317 = sand.u32 %s169, 1
        %s318 = scalar_lea.sflag [#allocation4], %s317
        %s319 = sand.u32 %s169, 1
        %s320 = smul.addr %s319, 8
        %s321 = scalar_lea.vmem [#allocation10], %s320
        %p322 = scmp.lt.s32.totalorder %s25, 1
        %s323 = scalar_select %p322, %s25, 1
        %s324 = smul.addr %s323, 8
        %s325 = scalar_lea.vmem %s5, %s324
        %v327 = vld [vmem:[%s277] sm:$0xff]
        %v328 = vpack.c.bf16 %v327, %v327
        %v329 = vld [vmem:[#allocation5] sm:$0xff]
        %v330 = vld [vmem:[#allocation5 + $0x8] sm:$0xff]
        %v331 = vld [vmem:[#allocation5 + $0x10] sm:$0xff]
        %v332 = vld [vmem:[#allocation5 + $0x18] sm:$0xff]
        %v333 = vld [vmem:[%s2] sm:$0x3]
        %v335 = vlaneseq
        %v336 = vshrl.u32 %v335, 7
        %v337 = vsub.s32 0, %v336
        %v338 = vrot.slane %v333, %v337
        %v339 = vlaneseq
        %v340 = vshrl.u32 %v339, 7
        %v341 = vsub.s32 1, %v340
        %v342 = vrot.slane %v333, %v341
        %v349 = vunpack.c.l.b16 %v329
        %v350 = vunpack.c.h.b16 %v329
        %v351 = vunpack.c.l.b16 %v330
        %v352 = vunpack.c.h.b16 %v330
        %v353 = vunpack.c.l.b16 %v331
        %v354 = vunpack.c.h.b16 %v331
        %v355 = vunpack.c.l.b16 %v332
        %v356 = vunpack.c.h.b16 %v332
        %v357 = vpack.c.b16 %v351, %v349
        %v358 = vpack.c.b16 %v352, %v350
        %v359 = vpack.c.b16 %v355, %v353
        %v360 = vpack.c.b16 %v356, %v354
        %vm365 = vcmask 261120
        %v367 = vsel %vm365, %v328, 0
        %369 = vmatprep.subr.bf16.mxu0 %v358
        %370 = vmatpush1.bf16.msra.mxu0 %v357
        %371 = vmatprep.subr.bf16.mxu0 %v360
        %372 = vmatpush1.bf16.msra.mxu0 %v359
        %373 = vmatprep.subr.bf16.mxu0 0
        %374 = vmatpush1.bf16.msra.mxu0 0
        %375 = vmatprep.subr.bf16.mxu0 0
        %376 = vmatpush1.bf16.msra.mxu0 0
        %377 = vmatprep.subr.bf16.mxu0 0
        %378 = vmatpush1.bf16.msra.mxu0 0
        %379 = vmatprep.subr.bf16.mxu0 0
        %380 = vmatpush1.bf16.msra.mxu0 0
        %381 = vmatprep.subr.bf16.mxu0 0
        %382 = vmatpush1.bf16.msra.mxu0 0
        %383 = vmatprep.subr.bf16.mxu0 0
        %384 = vmatpush1.bf16.msra.mxu0 0
        %385 = vmatprep.subr.bf16.mxu0 0
        %386 = vmatpush1.bf16.msra.mxu0 0
        %387 = vmatprep.subr.bf16.mxu0 0
        %388 = vmatpush1.bf16.msra.mxu0 0
        %389 = vmatprep.subr.bf16.mxu0 0
        %390 = vmatpush1.bf16.msra.mxu0 0
        %391 = vmatprep.subr.bf16.mxu0 0
        %392 = vmatpush1.bf16.msra.mxu0 0
        %393 = vmatprep.subr.bf16.mxu0 0
        %394 = vmatpush1.bf16.msra.mxu0 0
        %395 = vmatprep.subr.bf16.mxu0 0
        %396 = vmatpush1.bf16.msra.mxu0 0
        %397 = vmatprep.subr.bf16.mxu0 0
        %398 = vmatpush1.bf16.msra.mxu0 0
        %399 = vmatprep.subr.bf16.mxu0 0
        %400 = vmatpush1.bf16.msra.mxu0 0
        %401 = vmatprep.mubr.bf16.mxu0 0
        %402 = vmatmul.mubr.bf16.gmra.mrb[0].mxu0 %v367
        %v403 = vpop.f32.mrb[0].mxu0
        %v404 = vadd.f32 %v338, %v403
        %v405 = vpop.f32.mrb[0].mxu0
        %v406 = vadd.f32 %v342, %v405
        %v407 = vpop.f32.mrb[0].mxu0
        %v408 = vpop.f32.mrb[0].mxu0
        %409 = vdwg.mxu0
        %v410 = vmax.f32 %v404, 0.0
        %v411 = vmax.f32 %v406, 0.0
        %v412 = vpack.c.bf16 %v410, %v410
        %v413 = vpack.c.bf16 %v411, %v411
        %v414 = vld [vmem:[#allocation7] sm:$0xf]
        %v415 = vld [vmem:[#allocation7 + $0x4] sm:$0xf]
        %v416 = vld [vmem:[#allocation7 + $0x8] sm:$0xf]
        %v417 = vld [vmem:[#allocation7 + $0xc] sm:$0xf]
        %v418 = vld [vmem:[#allocation7 + $0x10] sm:$0xf]
        %v419 = vld [vmem:[#allocation7 + $0x14] sm:$0xf]
        %v420 = vld [vmem:[#allocation7 + $0x18] sm:$0xf]
        %v421 = vld [vmem:[#allocation7 + $0x1c] sm:$0xf]
        %v422 = vld [vmem:[#allocation7 + $0x20] sm:$0xf]
        %v423 = vld [vmem:[#allocation7 + $0x24] sm:$0xf]
        %v424 = vld [vmem:[#allocation7 + $0x28] sm:$0xf]
        %v425 = vld [vmem:[#allocation7 + $0x2c] sm:$0xf]
        %v426 = vld [vmem:[#allocation7 + $0x30] sm:$0xf]
        %v427 = vld [vmem:[#allocation7 + $0x34] sm:$0xf]
        %v428 = vld [vmem:[#allocation7 + $0x38] sm:$0xf]
        %v429 = vld [vmem:[#allocation7 + $0x3c] sm:$0xf]
        %v430 = vld [vmem:[#allocation7 + $0x40] sm:$0xf]
        %v431 = vld [vmem:[#allocation7 + $0x44] sm:$0xf]
        %v432 = vld [vmem:[#allocation7 + $0x48] sm:$0xf]
        %v433 = vld [vmem:[#allocation7 + $0x4c] sm:$0xf]
        %v434 = vld [vmem:[#allocation7 + $0x50] sm:$0xf]
        %v435 = vld [vmem:[#allocation7 + $0x54] sm:$0xf]
        %v436 = vld [vmem:[#allocation7 + $0x58] sm:$0xf]
        %v437 = vld [vmem:[#allocation7 + $0x5c] sm:$0xf]
        %v438 = vld [vmem:[#allocation7 + $0x60] sm:$0xf]
        %v439 = vld [vmem:[#allocation7 + $0x64] sm:$0xf]
        %v440 = vld [vmem:[#allocation7 + $0x68] sm:$0xf]
        %v441 = vld [vmem:[#allocation7 + $0x6c] sm:$0xf]
        %v442 = vld [vmem:[#allocation7 + $0x70] sm:$0xf]
        %v443 = vld [vmem:[#allocation7 + $0x74] sm:$0xf]
        %v444 = vld [vmem:[#allocation7 + $0x78] sm:$0xf]
        %v445 = vld [vmem:[#allocation7 + $0x7c] sm:$0xf]
        %v446 = vld [vmem:[#allocation8] sm:$0x1]
        %v448 = vlaneseq
        %v449 = vshrl.u32 %v448, 7
        %v450 = vsub.s32 0, %v449
        %v451 = vrot.slane %v446, %v450
        %v485 = vunpack.c.l.b16 %v414
        %v486 = vunpack.c.l.b16 %v415
        %v487 = vunpack.c.l.b16 %v416
        %v488 = vunpack.c.l.b16 %v417
        %v489 = vunpack.c.l.b16 %v418
        %v490 = vunpack.c.l.b16 %v419
        %v491 = vunpack.c.l.b16 %v420
        %v492 = vunpack.c.l.b16 %v421
        %v493 = vunpack.c.l.b16 %v422
        %v494 = vunpack.c.l.b16 %v423
        %v495 = vunpack.c.l.b16 %v424
        %v496 = vunpack.c.l.b16 %v425
        %v497 = vunpack.c.l.b16 %v426
        %v498 = vunpack.c.l.b16 %v427
        %v499 = vunpack.c.l.b16 %v428
        %v500 = vunpack.c.l.b16 %v429
        %v501 = vunpack.c.l.b16 %v430
        %v502 = vunpack.c.l.b16 %v431
        %v503 = vunpack.c.l.b16 %v432
        %v504 = vunpack.c.l.b16 %v433
        %v505 = vunpack.c.l.b16 %v434
        %v506 = vunpack.c.l.b16 %v435
        %v507 = vunpack.c.l.b16 %v436
        %v508 = vunpack.c.l.b16 %v437
        %v509 = vunpack.c.l.b16 %v438
        %v510 = vunpack.c.l.b16 %v439
        %v511 = vunpack.c.l.b16 %v440
        %v512 = vunpack.c.l.b16 %v441
        %v513 = vunpack.c.l.b16 %v442
        %v514 = vunpack.c.l.b16 %v443
        %v515 = vunpack.c.l.b16 %v444
        %v516 = vunpack.c.l.b16 %v445
        %v517 = vpack.c.b16 %v486, %v485
        %v518 = vpack.c.b16 %v488, %v487
        %v519 = vpack.c.b16 %v490, %v489
        %v520 = vpack.c.b16 %v492, %v491
        %v521 = vpack.c.b16 %v494, %v493
        %v522 = vpack.c.b16 %v496, %v495
        %v523 = vpack.c.b16 %v498, %v497
        %v524 = vpack.c.b16 %v500, %v499
        %v525 = vpack.c.b16 %v502, %v501
        %v526 = vpack.c.b16 %v504, %v503
        %v527 = vpack.c.b16 %v506, %v505
        %v528 = vpack.c.b16 %v508, %v507
        %v529 = vpack.c.b16 %v510, %v509
        %v530 = vpack.c.b16 %v512, %v511
        %v531 = vpack.c.b16 %v514, %v513
        %v532 = vpack.c.b16 %v516, %v515
        %549 = vmatprep.subr.bf16.mxu0 0
        %550 = vmatpush1.bf16.msra.mxu0 %v517
        %551 = vmatprep.subr.bf16.mxu0 0
        %552 = vmatpush1.bf16.msra.mxu0 %v518
        %553 = vmatprep.subr.bf16.mxu0 0
        %554 = vmatpush1.bf16.msra.mxu0 %v519
        %555 = vmatprep.subr.bf16.mxu0 0
        %556 = vmatpush1.bf16.msra.mxu0 %v520
        %557 = vmatprep.subr.bf16.mxu0 0
        %558 = vmatpush1.bf16.msra.mxu0 %v521
        %559 = vmatprep.subr.bf16.mxu0 0
        %560 = vmatpush1.bf16.msra.mxu0 %v522
        %561 = vmatprep.subr.bf16.mxu0 0
        %562 = vmatpush1.bf16.msra.mxu0 %v523
        %563 = vmatprep.subr.bf16.mxu0 0
        %564 = vmatpush1.bf16.msra.mxu0 %v524
        %565 = vmatprep.subr.bf16.mxu0 0
        %566 = vmatpush1.bf16.msra.mxu0 %v525
        %567 = vmatprep.subr.bf16.mxu0 0
        %568 = vmatpush1.bf16.msra.mxu0 %v526
        %569 = vmatprep.subr.bf16.mxu0 0
        %570 = vmatpush1.bf16.msra.mxu0 %v527
        %571 = vmatprep.subr.bf16.mxu0 0
        %572 = vmatpush1.bf16.msra.mxu0 %v528
        %573 = vmatprep.subr.bf16.mxu0 0
        %574 = vmatpush1.bf16.msra.mxu0 %v529
        %575 = vmatprep.subr.bf16.mxu0 0
        %576 = vmatpush1.bf16.msra.mxu0 %v530
        %577 = vmatprep.subr.bf16.mxu0 0
        %578 = vmatpush1.bf16.msra.mxu0 %v531
        %579 = vmatprep.subr.bf16.mxu0 0
        %580 = vmatpush1.bf16.msra.mxu0 %v532
        %581 = vmatprep.mubr.bf16.mxu0 %v413
        %582 = vmatmul.mubr.bf16.gmra.mrb[0].mxu0 %v412
        %v583 = vpop.f32.mrb[0].mxu0
        %v584 = vadd.f32 %v451, %v583
        %v585 = vpop.f32.mrb[0].mxu0
        %v586 = vpop.f32.mrb[0].mxu0
        %v587 = vpop.f32.mrb[0].mxu0
        %588 = vdwg.mxu0
        %v589 = vxor.u32 %v584, 2147483648
        %v590 = vmul.f32 %v589, 1.442695
        %v591 = vpow.pop %v590
        %v592 = vadd.f32 %v591, 1.0
        %v593 = vrcp.pop %v592
        %v594 = vmul.f32 1.0, %v593
        %v595 = vld [vmem:[%s325] sm:$0xff]
        %vm596 = vcmp.lt.f32.partialorder %v595, %v594
        %v597 = vsel %vm596, 1, 0
        %v598 = vcvt.s32.f32 %v597
        %599 = vst [vmem:[%s321] sm:$0xff] %v598
        %s600 = sand.u32 %s169, 1
        %s601 = scalar_lea.sflag [#allocation4], %s600
        %s602 = sand.u32 %s169, 1
        %s603 = smul.addr %s602, 8
        %s604 = scalar_lea.vmem [#allocation10], %s603
        // Predicated region
        $region61: #{tpu_custom_call.1} parent=43 // pred_check
          %p605 = pneg %p179
        $region62: #{tpu_custom_call.1} parent=43 // pred_check_branch
          %607 = sbr.rel (%p605) target = $region64
        $region63: #{tpu_custom_call.1} parent=43 // pred_region
          %s609 = ssub.s32 128, 128
          %610 = vsyncadd %s601, %s609
          %s611 = smul.addr %s25, 128
          %s612 = scalar_lea.hbm %s6, %s611
          %s614 = sshll.u32 %s604, 4
          %s615 = int_to_ptr.vmem [resolvable:$true] %s614
          %617 = dma.vmem_to_hbm [thread:$0]  %s615, 128, %s612, %s601
        $region64: #{tpu_custom_call.1} parent=43 // pred_fallthru
          _
      $region44: #{tpu_custom_call.1} parent=5 // pred_fallthru
        _
      %p618 = scmp.le.s32.totalorder 2, %s20
      // Predicated region
      $region65: #{tpu_custom_call.1} parent=5 // pred_check
        %p619 = pneg %p618
      $region66: #{tpu_custom_call.1} parent=5 // pred_check_branch
        %621 = sbr.rel (%p619) target = $region68
      $region67: #{tpu_custom_call.1} parent=5 // pred_region
        %s622 = ssub.s32 %s20, 2
        // Predicated region
        $region69: #{tpu_custom_call.1} parent=67 // pred_check
          %p623 = pneg %p185
        $region70: #{tpu_custom_call.1} parent=67 // pred_check_branch
          %625 = sbr.rel (%p623) target = $region72
        $region71: #{tpu_custom_call.1} parent=67 // pred_region
          %s626 = sand.u32 %s170, 1
          %s627 = scalar_lea.sflag [#allocation4], %s626
          %s628 = sand.u32 %s170, 1
          %s629 = smul.addr %s628, 8
          %s630 = scalar_lea.vmem [#allocation10], %s629
          %631 = dma.done %s627, 128
        $region72: #{tpu_custom_call.1} parent=67 // pred_fallthru
          _
      $region68: #{tpu_custom_call.1} parent=5 // pred_fallthru
        _
    $region6: #{tpu_custom_call.1} parent=1 // loop_footer
      %s24 = sadd.s32 1, %s20
    $region7: #{tpu_custom_call.1} parent=1 // loop_footer_branch
      %19 = sbr.rel target = $region3
    $region8: #{tpu_custom_call.1} parent=1 // loop_exit
      _
    %632 = vsyncpa [#allocation3], 1
    %s633 = scalar_lea.sflag [#allocation3], 1
    %634 = vsyncpa %s633, 1
    %635 = vsyncpa [#allocation6], 1
    %636 = vsyncpa [#allocation9], 1
    %637 = vsyncpa [#allocation4], 1
    %s638 = scalar_lea.sflag [#allocation4], 1
    %639 = vsyncpa %s638, 1

</llo_original>
